<compile_context>
chip_gen: v6e
topology: v6e:2x2x1
jax: 0.10.0
libtpu: 0.0.40
codegen_flags: <defaults>
</compile_context>

<pallas_src>
import jax
import jax.numpy as jnp
from jax.experimental import pallas as pl
from jax.experimental.pallas import tpu as pltpu

IN_FEATURES = 784
HIDDEN = 40
HIDDEN_PAD = 128  # lane-dense hidden width (multiple of 128)


def _round_up(n, m):
    return ((n + m - 1) // m) * m


def _chip_defaults():
    """Returns (tb_max, vmem_limit_bytes) tuned per chip generation, with a safe fallback."""
    try:
        vmem_cap = pltpu.get_tpu_info().vmem_capacity_bytes
    except Exception:
        return 1024, None
    if vmem_cap >= 128 * 1024 * 1024:
        # v5e / v6e: 128 MiB physical; raise the scoped limit so TB=2048 also fits f32 x.
        return 2048, 64 * 1024 * 1024
    # v7x: 64 MiB physical, 32 MiB scoped default is plenty for the bf16-x footprint.
    return 2048, None


def quadnet_kernel(x_ref, w1_ref, b1_ref, w2_ref, o_ref):
    # x_ref:  (TB, 784)  bf16 preferred (f32 accepted, cast here under the DMA)
    # w1_ref: (784, 128) bf16   b1_ref: (1, 128) f32   w2_ref: (128, C) f32
    # o_ref:  (TB, C)    f32
    x = x_ref[...]
    if x.dtype != jnp.bfloat16:
        x = x.astype(jnp.bfloat16)

    # proj1: Linear(784 -> 40[padded 128]) with bias; bf16 MXU inputs, f32 accumulate.
    h = jnp.dot(x, w1_ref[...], preferred_element_type=jnp.float32) + b1_ref[...]

    # elementwise square (f32 VPU)
    h = h * h

    # diag1: Linear(40[padded 128] -> C), no bias. Padded rows of W2 are zero.
    logits = jnp.dot(h, w2_ref[...], preferred_element_type=jnp.float32)

    # log_softmax over the last axis, numerically stable, all f32.
    # Ragged last batch tile: padded rows are garbage but strictly row-local and are
    # dropped by Pallas output-block masking on store.
    m = jnp.max(logits, axis=-1, keepdims=True)
    s = logits - m
    lse = jnp.log(jnp.sum(jnp.exp(s), axis=-1, keepdims=True))
    o_ref[...] = (s - lse).astype(o_ref.dtype)


def quadnet_forward(x, w1, b1, w2, *, tb_max=None, vmem_limit_bytes=None,
                    fuse_f32_input_cast=False):
    """QuadNet forward.

    x:  any shape whose trailing elements flatten to (-1, 784). Pass bf16 to halve the
        dominant HBM read; f32 is accepted and cast to bf16 inside the kernel.
    w1: (784, 40)  proj1 weight (transposed vs. torch), b1: (40,), w2: (40, C) diag1.
    fuse_f32_input_cast: if True and x is f32, cast to bf16 in the wrapper and allow
        XLA to fuse that cast into the pallas_call input (allow_input_fusion).
    """
    if tb_max is None or vmem_limit_bytes is None:
        d_tb, d_vmem = _chip_defaults()
        if tb_max is None:
            tb_max = d_tb
        if vmem_limit_bytes is None:
            vmem_limit_bytes = d_vmem

    x2 = x.reshape(-1, IN_FEATURES)  # free view; dtype handled below / in kernel
    allow_input_fusion = None
    if fuse_f32_input_cast and x2.dtype == jnp.float32:
        # Producer must stay f32: cast here and let XLA fuse it into the input DMA.
        x2 = x2.astype(jnp.bfloat16)
        allow_input_fusion = [True, False, False, False]

    B = x2.shape[0]
    C = w2.shape[1]

    # One-time parameter prep (tiny): bf16 first-layer weight, zero-pad hidden 40 -> 128.
    w1p = jnp.zeros((IN_FEATURES, HIDDEN_PAD), jnp.bfloat16)
    w1p = w1p.at[:, :HIDDEN].set(w1.astype(jnp.bfloat16))
    b1p = jnp.zeros((1, HIDDEN_PAD), jnp.float32)
    b1p = b1p.at[:, :HIDDEN].set(b1.astype(jnp.float32))
    w2p = jnp.zeros((HIDDEN_PAD, C), jnp.float32)
    w2p = w2p.at[:HIDDEN, :].set(w2.astype(jnp.float32))

    # Batch tile: tiny B gets a full-extent block; otherwise split into >= 2 grid steps
    # (cap at tb_max) so both v7x TensorCores get work and DMA/compute pipelining runs.
    # Rows are independent, so ragged last blocks rely on Pallas output masking.
    if B <= 8:
        tb = B
    else:
        tb = min(tb_max, _round_up(pl.cdiv(B, 2), 8))
    grid = (pl.cdiv(B, tb),)

    cost = pl.CostEstimate(
        flops=2 * B * IN_FEATURES * HIDDEN_PAD + 2 * B * HIDDEN_PAD * C,
        transcendentals=B * C,  # exp in log_softmax
        bytes_accessed=B * IN_FEATURES * x2.dtype.itemsize + B * C * 4
        + IN_FEATURES * HIDDEN_PAD * 2 + HIDDEN_PAD * C * 4 + HIDDEN_PAD * 4,
    )

    return pl.pallas_call(
        quadnet_kernel,
        out_shape=jax.ShapeDtypeStruct((B, C), jnp.float32),
        grid=grid,
        in_specs=[
            pl.BlockSpec((tb, IN_FEATURES), lambda i: (i, 0)),          # x tile (pipelined)
            pl.BlockSpec((IN_FEATURES, HIDDEN_PAD), lambda i: (0, 0)),  # resident weights
            pl.BlockSpec((1, HIDDEN_PAD), lambda i: (0, 0)),
            pl.BlockSpec((HIDDEN_PAD, C), lambda i: (0, 0)),
        ],
        out_specs=pl.BlockSpec((tb, C), lambda i: (i, 0)),
        compiler_params=pltpu.CompilerParams(
            dimension_semantics=("parallel",),  # lets v7x shard batch tiles over 2 TCs
            vmem_limit_bytes=vmem_limit_bytes,
            allow_input_fusion=allow_input_fusion,
        ),
        cost_estimate=cost,
    )(x2, w1p, b1p, w2p)


def quadnet_reference_f32(x, w1, b1, w2):
    x2 = x.reshape(-1, IN_FEATURES).astype(jnp.float32)
    h = x2 @ w1 + b1[None, :]
    h = h * h
    logits = h @ w2
    return jax.nn.log_softmax(logits, axis=-1)


def quadnet_reference_bf16(x, w1, b1, w2):
    # Precision-matched reference: bf16 inputs to the first matmul, f32 accumulate,
    # everything after in f32 (mirrors the kernel's numerics).
    x2 = x.reshape(-1, IN_FEATURES).astype(jnp.bfloat16)
    h = jnp.dot(x2, w1.astype(jnp.bfloat16), preferred_element_type=jnp.float32)
    h = h + b1[None, :].astype(jnp.float32)
    h = h * h
    logits = jnp.dot(h, w2.astype(jnp.float32), preferred_element_type=jnp.float32)
    return jax.nn.log_softmax(logits, axis=-1)


if __name__ == "__main__":
    key = jax.random.PRNGKey(0)
    k_x, k_w1, k_b1, k_w2 = jax.random.split(key, 4)

    batch = 8
    output_size = 10

    # Shapes per nn.Linear in __init__:
    # proj1.weight (40, 784) -> stored transposed as (784, 40); proj1.bias (40,)
    # diag1.weight (output_size, 40) -> stored transposed as (40, output_size)
    w1 = jax.random.normal(k_w1, (IN_FEATURES, HIDDEN), dtype=jnp.float32) * 0.05
    b1 = jax.random.normal(k_b1, (HIDDEN,), dtype=jnp.float32) * 0.05
    w2 = jax.random.normal(k_w2, (HIDDEN, output_size), dtype=jnp.float32) * 0.1

    # Example input: NCHW images (batch, 1, 28, 28) -> view(-1, 784).
    x_f32 = jax.random.normal(k_x, (batch, 1, 28, 28), dtype=jnp.float32)
    x_bf16 = x_f32.astype(jnp.bfloat16)  # preferred input dtype: halves the HBM read of x

    # Preferred path: bf16 x straight from the producer.
    out = quadnet_forward(x_bf16, w1, b1, w2)
    out = jax.block_until_ready(out)
    assert out.shape == (batch, output_size)

    # f32 x also supported (cast to bf16 in-kernel) -> numerically identical result.
    out_f32_in = jax.block_until_ready(quadnet_forward(x_f32, w1, b1, w2))
    assert out_f32_in.shape == (batch, output_size)
    assert jnp.allclose(out, out_f32_in, atol=1e-5, rtol=1e-5), "bf16-x vs f32-x path mismatch"

    # Tight check vs a precision-matched (bf16-input matmul) reference.
    ref_bf16 = quadnet_reference_bf16(x_f32, w1, b1, w2)
    assert jnp.allclose(out, ref_bf16, atol=2e-3, rtol=2e-3), "mismatch vs bf16-matched reference"

    # Loose sanity check vs the full-f32 reference (bf16 first matmul + square
    # intentionally trades a few 1e-3 of accuracy for ~2x input bandwidth).
    ref_f32 = quadnet_reference_f32(x_f32, w1, b1, w2)
    assert jnp.allclose(out, ref_f32, atol=5e-2, rtol=5e-2), "mismatch vs f32 reference"

    print("KERNEL_OK")
</pallas_src>

<mosaic_0001>
module attributes {stable_mosaic.version = 11 : i64} {
  func.func @quadnet_kernel(%arg0: i32, %arg1: memref<8x784xbf16, #tpu.memory_space<vmem>>, %arg2: memref<784x128xbf16, #tpu.memory_space<vmem>>, %arg3: memref<1x128xf32, #tpu.memory_space<vmem>>, %arg4: memref<128x10xf32, #tpu.memory_space<vmem>>, %arg5: memref<8x10xf32, #tpu.memory_space<vmem>>) attributes {dimension_semantics = [#tpu.dimension_semantics<parallel>], iteration_bounds = array<i64: 1>, scalar_prefetch = 0 : i64, scratch_operands = 0 : i64, tpu.core_type = #tpu.core_type<tc>, window_params = [{transform_indices = @transform_0, window_bounds = array<i64: 8, 784>}, {pipeline_mode = #tpu.pipeline_mode<synchronous>, transform_indices = @transform_1, window_bounds = array<i64: 784, 128>}, {pipeline_mode = #tpu.pipeline_mode<synchronous>, transform_indices = @transform_2, window_bounds = array<i64: 1, 128>}, {pipeline_mode = #tpu.pipeline_mode<synchronous>, transform_indices = @transform_3, window_bounds = array<i64: 128, 10>}, {transform_indices = @transform_4, window_bounds = array<i64: 8, 10>}]} {
    %c0 = arith.constant 0 : index
    %c0_0 = arith.constant 0 : index
    %0 = vector.load %arg1[%c0, %c0_0] : memref<8x784xbf16, #tpu.memory_space<vmem>>, vector<8x784xbf16>
    %c0_1 = arith.constant 0 : index
    %c0_2 = arith.constant 0 : index
    %1 = vector.load %arg2[%c0_1, %c0_2] : memref<784x128xbf16, #tpu.memory_space<vmem>>, vector<784x128xbf16>
    %cst = arith.constant dense<0.000000e+00> : vector<8x128xf32>
    %2 = tpu.matmul %0, %1, %cst {dimension_numbers = #tpu.dot_dimension_numbers<[1], [0], [0], [1], [0, 0, 1, 1], [], []>} : vector<8x784xbf16>, vector<784x128xbf16>, vector<8x128xf32> -> vector<8x128xf32>
    %c0_3 = arith.constant 0 : index
    %c0_4 = arith.constant 0 : index
    %3 = vector.load %arg3[%c0_3, %c0_4] : memref<1x128xf32, #tpu.memory_space<vmem>>, vector<1x128xf32>
    %4 = vector.broadcast %3 : vector<1x128xf32> to vector<8x128xf32>
    %5 = arith.addf %2, %4 : vector<8x128xf32>
    %6 = arith.mulf %5, %5 : vector<8x128xf32>
    %c0_5 = arith.constant 0 : index
    %c0_6 = arith.constant 0 : index
    %7 = vector.load %arg4[%c0_5, %c0_6] : memref<128x10xf32, #tpu.memory_space<vmem>>, vector<128x10xf32>
    %cst_7 = arith.constant dense<0.000000e+00> : vector<8x10xf32>
    %8 = tpu.matmul %6, %7, %cst_7 {dimension_numbers = #tpu.dot_dimension_numbers<[1], [0], [0], [1], [0, 0, 1, 1], [], []>} : vector<8x128xf32>, vector<128x10xf32>, vector<8x10xf32> -> vector<8x10xf32>
    %cst_8 = arith.constant dense<0xFF800000> : vector<8xf32>
    %9 = vector.multi_reduction <maximumf>, %8, %cst_8 [1] : vector<8x10xf32> to vector<8xf32>
    %10 = vector.shape_cast %9 : vector<8xf32> to vector<8x1xf32>
    %11 = vector.broadcast %10 : vector<8x1xf32> to vector<8x10xf32>
    %12 = arith.subf %8, %11 : vector<8x10xf32>
    %13 = math.exp %12 : vector<8x10xf32>
    %cst_9 = arith.constant dense<0.000000e+00> : vector<8xf32>
    %14 = vector.multi_reduction <add>, %13, %cst_9 [1] : vector<8x10xf32> to vector<8xf32>
    %15 = vector.shape_cast %14 : vector<8xf32> to vector<8x1xf32>
    %16 = math.log %15 : vector<8x1xf32>
    %17 = vector.broadcast %16 : vector<8x1xf32> to vector<8x10xf32>
    %18 = arith.subf %12, %17 : vector<8x10xf32>
    %c0_10 = arith.constant 0 : index
    %c0_11 = arith.constant 0 : index
    %19 = vector.load %arg5[%c0_10, %c0_11] : memref<8x10xf32, #tpu.memory_space<vmem>>, vector<8x10xf32>
    tpu.vector_store %arg5[%c0_10, %c0_11], %18 {strides = array<i32>} : memref<8x10xf32, #tpu.memory_space<vmem>>, vector<8x10xf32>,
    return
  }
  func.func @transform_0(%arg0: i32) -> (i32, i32) {
    %c0_i32 = arith.constant 0 : i32
    %c0_i32_0 = arith.constant 0 : i32
    return %arg0, %c0_i32 : i32, i32
  }
  func.func @transform_1(%arg0: i32) -> (i32, i32) {
    %c0_i32 = arith.constant 0 : i32
    %c0_i32_0 = arith.constant 0 : i32
    %c0_i32_1 = arith.constant 0 : i32
    return %c0_i32, %c0_i32_0 : i32, i32
  }
  func.func @transform_2(%arg0: i32) -> (i32, i32) {
    %c0_i32 = arith.constant 0 : i32
    %c0_i32_0 = arith.constant 0 : i32
    %c0_i32_1 = arith.constant 0 : i32
    return %c0_i32, %c0_i32_0 : i32, i32
  }
  func.func @transform_3(%arg0: i32) -> (i32, i32) {
    %c0_i32 = arith.constant 0 : i32
    %c0_i32_0 = arith.constant 0 : i32
    %c0_i32_1 = arith.constant 0 : i32
    return %c0_i32, %c0_i32_0 : i32, i32
  }
  func.func @transform_4(%arg0: i32) -> (i32, i32) {
    %c0_i32 = arith.constant 0 : i32
    %c0_i32_0 = arith.constant 0 : i32
    return %arg0, %c0_i32 : i32, i32
  }
}

</mosaic_0001>

<llo_original>
// kernel: tpu_custom_call.1
$region0: #{tpu_custom_call.1}
  #allocation0 [shape = 'u32[]', space=smem, size = 0x4, offset = 0x4, fixed_abs, tag = 'smem constant byte address 0x4 - core index']
  #allocation1 [shape = 'u32[144,128]{1,0:T(1,128)}', space=vmem, size = 0x12000, scoped, tag = 'internal scratch']
  %s0 = inlined_call_operand.vmem [shape: bf16[8,784], index: 0, kind: input, shape index: {}]
  %s1 = inlined_call_operand.hbm [shape: bf16[784,128], index: 1, kind: input, shape index: {}]
  %s2 = inlined_call_operand.vmem [shape: f32[1,128], index: 2, kind: input, shape index: {}]
  %s3 = inlined_call_operand.vmem [shape: f32[128,10], index: 3, kind: input, shape index: {}]
  %s4 = inlined_call_operand.hbm [shape: f32[8,10], index: 4, kind: output, shape index: {}]
  %s5 = sld [smem:[#allocation0]]
  $region30: #{tpu_custom_call.1} parent=0
    _
  %s7 = ssub.s32 1, %s5
  %s8 = scalar_select 0, %s7, %s5
  $region1: #{tpu_custom_call.1} parent=0
    #allocation2 [shape = 'u8[200704]{0}', space=vmem, size = 0x31000, scoped, tag = 'input window, operand 1, single buffered']
    #allocation3 [shape = 's32[1]{0}', space=sflag, size = 0x4, scoped, tag = 'scoped memory for tpu_custom_call.1']
    #allocation4 [shape = 's32[1]{0}', space=sflag, size = 0x4, scoped, tag = 'scoped memory for tpu_custom_call.1']
    #allocation5 [shape = 'u8[4096]{0}', space=vmem, size = 0x1000, scoped, tag = 'output window, operand 0, single buffered']
    %9 = vsyncpa [#allocation3], 0
    %10 = vsyncpa [#allocation4], 0
    // Predicated region
    $region2: #{tpu_custom_call.1} parent=1 // pred_check
      _
    $region3: #{tpu_custom_call.1} parent=1 // pred_check_branch
      %12 = sbr.rel (0) target = $region5
    $region4: #{tpu_custom_call.1} parent=1 // pred_region
      _
    $region5: #{tpu_custom_call.1} parent=1 // pred_fallthru
      _
    // Predicated region
    $region6: #{tpu_custom_call.1} parent=1 // pred_check
      _
    $region7: #{tpu_custom_call.1} parent=1 // pred_check_branch
      %14 = sbr.rel (0) target = $region9
    $region8: #{tpu_custom_call.1} parent=1 // pred_region
      %s16 = ssub.s32 6272, 6272
      %17 = vsyncadd [#allocation3], %s16
      %s18 = sshll.u32 [#allocation2], 4
      %s19 = int_to_ptr.vmem [resolvable:$true] %s18
      %24 = dma.hbm_to_vmem [thread:$0]  %s1, 6272, %s19, [#allocation3], 64, 64, 4
    $region9: #{tpu_custom_call.1} parent=1 // pred_fallthru
      _
    // Predicated region
    $region10: #{tpu_custom_call.1} parent=1 // pred_check
      _
    $region11: #{tpu_custom_call.1} parent=1 // pred_check_branch
      %26 = sbr.rel (0) target = $region13
    $region12: #{tpu_custom_call.1} parent=1 // pred_region
      _
    $region13: #{tpu_custom_call.1} parent=1 // pred_fallthru
      _
    // Predicated region
    $region14: #{tpu_custom_call.1} parent=1 // pred_check
      _
    $region15: #{tpu_custom_call.1} parent=1 // pred_check_branch
      %28 = sbr.rel (0) target = $region17
    $region16: #{tpu_custom_call.1} parent=1 // pred_region
      _
    $region17: #{tpu_custom_call.1} parent=1 // pred_fallthru
      _
    // Predicated region
    $region18: #{tpu_custom_call.1} parent=1 // pred_check
      _
    $region19: #{tpu_custom_call.1} parent=1 // pred_check_branch
      %30 = sbr.rel (0) target = $region21
    $region20: #{tpu_custom_call.1} parent=1 // pred_region
      %31 = dma.done [#allocation3], 6272
    $region21: #{tpu_custom_call.1} parent=1 // pred_fallthru
      _
    %v33 = vld [vmem:[%s0] sm:$0xff]
    %v34 = vld [vmem:[%s0 + $0x8] sm:$0xff]
    %v35 = vld [vmem:[%s0 + $0x10] sm:$0xff]
    %v36 = vld [vmem:[%s0 + $0x18] sm:$0xf]
    %v37 = vld [vmem:[#allocation2] sm:$0xf]
    %v38 = vld [vmem:[#allocation2 + $0x4] sm:$0xf]
    %v39 = vld [vmem:[#allocation2 + $0x8] sm:$0xf]
    %v40 = vld [vmem:[#allocation2 + $0xc] sm:$0xf]
    %v41 = vld [vmem:[#allocation2 + $0x10] sm:$0xf]
    %v42 = vld [vmem:[#allocation2 + $0x14] sm:$0xf]
    %v43 = vld [vmem:[#allocation2 + $0x18] sm:$0xf]
    %v44 = vld [vmem:[#allocation2 + $0x1c] sm:$0xf]
    %v45 = vld [vmem:[#allocation2 + $0x20] sm:$0xf]
    %v46 = vld [vmem:[#allocation2 + $0x24] sm:$0xf]
    %v47 = vld [vmem:[#allocation2 + $0x28] sm:$0xf]
    %v48 = vld [vmem:[#allocation2 + $0x2c] sm:$0xf]
    %v49 = vld [vmem:[#allocation2 + $0x30] sm:$0xf]
    %v50 = vld [vmem:[#allocation2 + $0x34] sm:$0xf]
    %v51 = vld [vmem:[#allocation2 + $0x38] sm:$0xf]
    %v52 = vld [vmem:[#allocation2 + $0x3c] sm:$0xf]
    %v53 = vld [vmem:[#allocation2 + $0x40] sm:$0xf]
    %v54 = vld [vmem:[#allocation2 + $0x44] sm:$0xf]
    %v55 = vld [vmem:[#allocation2 + $0x48] sm:$0xf]
    %v56 = vld [vmem:[#allocation2 + $0x4c] sm:$0xf]
    %v57 = vld [vmem:[#allocation2 + $0x50] sm:$0xf]
    %v58 = vld [vmem:[#allocation2 + $0x54] sm:$0xf]
    %v59 = vld [vmem:[#allocation2 + $0x58] sm:$0xf]
    %v60 = vld [vmem:[#allocation2 + $0x5c] sm:$0xf]
    %v61 = vld [vmem:[#allocation2 + $0x60] sm:$0xf]
    %v62 = vld [vmem:[#allocation2 + $0x64] sm:$0xf]
    %v63 = vld [vmem:[#allocation2 + $0x68] sm:$0xf]
    %v64 = vld [vmem:[#allocation2 + $0x6c] sm:$0xf]
    %v65 = vld [vmem:[#allocation2 + $0x70] sm:$0xf]
    %v66 = vld [vmem:[#allocation2 + $0x74] sm:$0xf]
    %v67 = vld [vmem:[#allocation2 + $0x78] sm:$0xf]
    %v68 = vld [vmem:[#allocation2 + $0x7c] sm:$0xf]
    %v69 = vld [vmem:[#allocation2 + $0x80] sm:$0xf]
    %v70 = vld [vmem:[#allocation2 + $0x84] sm:$0xf]
    %v71 = vld [vmem:[#allocation2 + $0x88] sm:$0xf]
    %v72 = vld [vmem:[#allocation2 + $0x8c] sm:$0xf]
    %v73 = vld [vmem:[#allocation2 + $0x90] sm:$0xf]
    %v74 = vld [vmem:[#allocation2 + $0x94] sm:$0xf]
    %v75 = vld [vmem:[#allocation2 + $0x98] sm:$0xf]
    %v76 = vld [vmem:[#allocation2 + $0x9c] sm:$0xf]
    %v77 = vld [vmem:[#allocation2 + $0xa0] sm:$0xf]
    %v78 = vld [vmem:[#allocation2 + $0xa4] sm:$0xf]
    %v79 = vld [vmem:[#allocation2 + $0xa8] sm:$0xf]
    %v80 = vld [vmem:[#allocation2 + $0xac] sm:$0xf]
    %v81 = vld [vmem:[#allocation2 + $0xb0] sm:$0xf]
    %v82 = vld [vmem:[#allocation2 + $0xb4] sm:$0xf]
    %v83 = vld [vmem:[#allocation2 + $0xb8] sm:$0xf]
    %v84 = vld [vmem:[#allocation2 + $0xbc] sm:$0xf]
    %v85 = vld [vmem:[#allocation2 + $0xc0] sm:$0xf]
    %v86 = vld [vmem:[#allocation2 + $0xc4] sm:$0xf]
    %v87 = vld [vmem:[#allocation2 + $0xc8] sm:$0xf]
    %v88 = vld [vmem:[#allocation2 + $0xcc] sm:$0xf]
    %v89 = vld [vmem:[#allocation2 + $0xd0] sm:$0xf]
    %v90 = vld [vmem:[#allocation2 + $0xd4] sm:$0xf]
    %v91 = vld [vmem:[#allocation2 + $0xd8] sm:$0xf]
    %v92 = vld [vmem:[#allocation2 + $0xdc] sm:$0xf]
    %v93 = vld [vmem:[#allocation2 + $0xe0] sm:$0xf]
    %v94 = vld [vmem:[#allocation2 + $0xe4] sm:$0xf]
    %v95 = vld [vmem:[#allocation2 + $0xe8] sm:$0xf]
    %v96 = vld [vmem:[#allocation2 + $0xec] sm:$0xf]
    %v97 = vld [vmem:[#allocation2 + $0xf0] sm:$0xf]
    %v98 = vld [vmem:[#allocation2 + $0xf4] sm:$0xf]
    %v99 = vld [vmem:[#allocation2 + $0xf8] sm:$0xf]
    %v100 = vld [vmem:[#allocation2 + $0xfc] sm:$0xf]
    %v101 = vld [vmem:[#allocation2 + $0x100] sm:$0xf]
    %v102 = vld [vmem:[#allocation2 + $0x104] sm:$0xf]
    %v103 = vld [vmem:[#allocation2 + $0x108] sm:$0xf]
    %v104 = vld [vmem:[#allocation2 + $0x10c] sm:$0xf]
    %v105 = vld [vmem:[#allocation2 + $0x110] sm:$0xf]
    %v106 = vld [vmem:[#allocation2 + $0x114] sm:$0xf]
    %v107 = vld [vmem:[#allocation2 + $0x118] sm:$0xf]
    %v108 = vld [vmem:[#allocation2 + $0x11c] sm:$0xf]
    %v109 = vld [vmem:[#allocation2 + $0x120] sm:$0xf]
    %v110 = vld [vmem:[#allocation2 + $0x124] sm:$0xf]
    %v111 = vld [vmem:[#allocation2 + $0x128] sm:$0xf]
    %v112 = vld [vmem:[#allocation2 + $0x12c] sm:$0xf]
    %v113 = vld [vmem:[#allocation2 + $0x130] sm:$0xf]
    %v114 = vld [vmem:[#allocation2 + $0x134] sm:$0xf]
    %v115 = vld [vmem:[#allocation2 + $0x138] sm:$0xf]
    %v116 = vld [vmem:[#allocation2 + $0x13c] sm:$0xf]
    %v117 = vld [vmem:[#allocation2 + $0x140] sm:$0xf]
    %v118 = vld [vmem:[#allocation2 + $0x144] sm:$0xf]
    %v119 = vld [vmem:[#allocation2 + $0x148] sm:$0xf]
    %v120 = vld [vmem:[#allocation2 + $0x14c] sm:$0xf]
    %v121 = vld [vmem:[#allocation2 + $0x150] sm:$0xf]
    %v122 = vld [vmem:[#allocation2 + $0x154] sm:$0xf]
    %v123 = vld [vmem:[#allocation2 + $0x158] sm:$0xf]
    %v124 = vld [vmem:[#allocation2 + $0x15c] sm:$0xf]
    %v125 = vld [vmem:[#allocation2 + $0x160] sm:$0xf]
    %v126 = vld [vmem:[#allocation2 + $0x164] sm:$0xf]
    %v127 = vld [vmem:[#allocation2 + $0x168] sm:$0xf]
    %v128 = vld [vmem:[#allocation2 + $0x16c] sm:$0xf]
    %v129 = vld [vmem:[#allocation2 + $0x170] sm:$0xf]
    %v130 = vld [vmem:[#allocation2 + $0x174] sm:$0xf]
    %v131 = vld [vmem:[#allocation2 + $0x178] sm:$0xf]
    %v132 = vld [vmem:[#allocation2 + $0x17c] sm:$0xf]
    %v133 = vld [vmem:[#allocation2 + $0x180] sm:$0xf]
    %v134 = vld [vmem:[#allocation2 + $0x184] sm:$0xf]
    %v135 = vld [vmem:[%s2] sm:$0x1]
    %v137 = vlaneseq
    %v138 = vshrl.u32 %v137, 7
    %v139 = vsub.s32 0, %v138
    %v140 = vrot.slane %v135, %v139
    %v146 = vunpack.c.l.b16 %v33
    %v147 = vunpack.c.h.b16 %v33
    %v148 = vunpack.c.l.b16 %v34
    %v149 = vunpack.c.h.b16 %v34
    %v150 = vunpack.c.l.b16 %v35
    %v151 = vunpack.c.h.b16 %v35
    %v152 = vunpack.c.l.b16 %v36
    %v153 = vpack.c.b16 %v146, %v146
    %v154 = vpack.c.b16 %v147, %v147
    %v155 = vpack.c.b16 %v148, %v148
    %v156 = vpack.c.b16 %v149, %v149
    %v157 = vpack.c.b16 %v150, %v150
    %v158 = vpack.c.b16 %v151, %v151
    %v159 = vpack.c.b16 %v152, %v152
    %v264 = vunpack.c.l.b16 %v37
    %v265 = vunpack.c.l.b16 %v38
    %v266 = vunpack.c.l.b16 %v39
    %v267 = vunpack.c.l.b16 %v40
    %v268 = vunpack.c.l.b16 %v41
    %v269 = vunpack.c.l.b16 %v42
    %v270 = vunpack.c.l.b16 %v43
    %v271 = vunpack.c.l.b16 %v44
    %v272 = vunpack.c.l.b16 %v45
    %v273 = vunpack.c.l.b16 %v46
    %v274 = vunpack.c.l.b16 %v47
    %v275 = vunpack.c.l.b16 %v48
    %v276 = vunpack.c.l.b16 %v49
    %v277 = vunpack.c.l.b16 %v50
    %v278 = vunpack.c.l.b16 %v51
    %v279 = vunpack.c.l.b16 %v52
    %v280 = vunpack.c.l.b16 %v53
    %v281 = vunpack.c.l.b16 %v54
    %v282 = vunpack.c.l.b16 %v55
    %v283 = vunpack.c.l.b16 %v56
    %v284 = vunpack.c.l.b16 %v57
    %v285 = vunpack.c.l.b16 %v58
    %v286 = vunpack.c.l.b16 %v59
    %v287 = vunpack.c.l.b16 %v60
    %v288 = vunpack.c.l.b16 %v61
    %v289 = vunpack.c.l.b16 %v62
    %v290 = vunpack.c.l.b16 %v63
    %v291 = vunpack.c.l.b16 %v64
    %v292 = vunpack.c.l.b16 %v65
    %v293 = vunpack.c.l.b16 %v66
    %v294 = vunpack.c.l.b16 %v67
    %v295 = vunpack.c.l.b16 %v68
    %v296 = vunpack.c.l.b16 %v69
    %v297 = vunpack.c.l.b16 %v70
    %v298 = vunpack.c.l.b16 %v71
    %v299 = vunpack.c.l.b16 %v72
    %v300 = vunpack.c.l.b16 %v73
    %v301 = vunpack.c.l.b16 %v74
    %v302 = vunpack.c.l.b16 %v75
    %v303 = vunpack.c.l.b16 %v76
    %v304 = vunpack.c.l.b16 %v77
    %v305 = vunpack.c.l.b16 %v78
    %v306 = vunpack.c.l.b16 %v79
    %v307 = vunpack.c.l.b16 %v80
    %v308 = vunpack.c.l.b16 %v81
    %v309 = vunpack.c.l.b16 %v82
    %v310 = vunpack.c.l.b16 %v83
    %v311 = vunpack.c.l.b16 %v84
    %v312 = vunpack.c.l.b16 %v85
    %v313 = vunpack.c.l.b16 %v86
    %v314 = vunpack.c.l.b16 %v87
    %v315 = vunpack.c.l.b16 %v88
    %v316 = vunpack.c.l.b16 %v89
    %v317 = vunpack.c.l.b16 %v90
    %v318 = vunpack.c.l.b16 %v91
    %v319 = vunpack.c.l.b16 %v92
    %v320 = vunpack.c.l.b16 %v93
    %v321 = vunpack.c.l.b16 %v94
    %v322 = vunpack.c.l.b16 %v95
    %v323 = vunpack.c.l.b16 %v96
    %v324 = vunpack.c.l.b16 %v97
    %v325 = vunpack.c.l.b16 %v98
    %v326 = vunpack.c.l.b16 %v99
    %v327 = vunpack.c.l.b16 %v100
    %v328 = vunpack.c.l.b16 %v101
    %v329 = vunpack.c.l.b16 %v102
    %v330 = vunpack.c.l.b16 %v103
    %v331 = vunpack.c.l.b16 %v104
    %v332 = vunpack.c.l.b16 %v105
    %v333 = vunpack.c.l.b16 %v106
    %v334 = vunpack.c.l.b16 %v107
    %v335 = vunpack.c.l.b16 %v108
    %v336 = vunpack.c.l.b16 %v109
    %v337 = vunpack.c.l.b16 %v110
    %v338 = vunpack.c.l.b16 %v111
    %v339 = vunpack.c.l.b16 %v112
    %v340 = vunpack.c.l.b16 %v113
    %v341 = vunpack.c.l.b16 %v114
    %v342 = vunpack.c.l.b16 %v115
    %v343 = vunpack.c.l.b16 %v116
    %v344 = vunpack.c.l.b16 %v117
    %v345 = vunpack.c.l.b16 %v118
    %v346 = vunpack.c.l.b16 %v119
    %v347 = vunpack.c.l.b16 %v120
    %v348 = vunpack.c.l.b16 %v121
    %v349 = vunpack.c.l.b16 %v122
    %v350 = vunpack.c.l.b16 %v123
    %v351 = vunpack.c.l.b16 %v124
    %v352 = vunpack.c.l.b16 %v125
    %v353 = vunpack.c.l.b16 %v126
    %v354 = vunpack.c.l.b16 %v127
    %v355 = vunpack.c.l.b16 %v128
    %v356 = vunpack.c.l.b16 %v129
    %v357 = vunpack.c.l.b16 %v130
    %v358 = vunpack.c.l.b16 %v131
    %v359 = vunpack.c.l.b16 %v132
    %v360 = vunpack.c.l.b16 %v133
    %v361 = vunpack.c.l.b16 %v134
    %v362 = vpack.c.b16 %v265, %v264
    %v363 = vpack.c.b16 %v267, %v266
    %v364 = vpack.c.b16 %v269, %v268
    %v365 = vpack.c.b16 %v271, %v270
    %v366 = vpack.c.b16 %v273, %v272
    %v367 = vpack.c.b16 %v275, %v274
    %v368 = vpack.c.b16 %v277, %v276
    %v369 = vpack.c.b16 %v279, %v278
    %v370 = vpack.c.b16 %v281, %v280
    %v371 = vpack.c.b16 %v283, %v282
    %v372 = vpack.c.b16 %v285, %v284
    %v373 = vpack.c.b16 %v287, %v286
    %v374 = vpack.c.b16 %v289, %v288
    %v375 = vpack.c.b16 %v291, %v290
    %v376 = vpack.c.b16 %v293, %v292
    %v377 = vpack.c.b16 %v295, %v294
    %v378 = vpack.c.b16 %v297, %v296
    %v379 = vpack.c.b16 %v299, %v298
    %v380 = vpack.c.b16 %v301, %v300
    %v381 = vpack.c.b16 %v303, %v302
    %v382 = vpack.c.b16 %v305, %v304
    %v383 = vpack.c.b16 %v307, %v306
    %v384 = vpack.c.b16 %v309, %v308
    %v385 = vpack.c.b16 %v311, %v310
    %v386 = vpack.c.b16 %v313, %v312
    %v387 = vpack.c.b16 %v315, %v314
    %v388 = vpack.c.b16 %v317, %v316
    %v389 = vpack.c.b16 %v319, %v318
    %v390 = vpack.c.b16 %v321, %v320
    %v391 = vpack.c.b16 %v323, %v322
    %v392 = vpack.c.b16 %v325, %v324
    %v393 = vpack.c.b16 %v327, %v326
    %v394 = vpack.c.b16 %v329, %v328
    %v395 = vpack.c.b16 %v331, %v330
    %v396 = vpack.c.b16 %v333, %v332
    %v397 = vpack.c.b16 %v335, %v334
    %v398 = vpack.c.b16 %v337, %v336
    %v399 = vpack.c.b16 %v339, %v338
    %v400 = vpack.c.b16 %v341, %v340
    %v401 = vpack.c.b16 %v343, %v342
    %v402 = vpack.c.b16 %v345, %v344
    %v403 = vpack.c.b16 %v347, %v346
    %v404 = vpack.c.b16 %v349, %v348
    %v405 = vpack.c.b16 %v351, %v350
    %v406 = vpack.c.b16 %v353, %v352
    %v407 = vpack.c.b16 %v355, %v354
    %v408 = vpack.c.b16 %v357, %v356
    %v409 = vpack.c.b16 %v359, %v358
    %v410 = vpack.c.b16 %v361, %v360
    %vm460 = vcmask 130048
    %v462 = vsel %vm460, %v159, 0
    %464 = vmatprep.subr.bf16.mxu0 0
    %465 = vmatpush1.bf16.msra.mxu0 %v369
    %466 = vmatprep.subr.bf16.mxu0 0
    %467 = vmatpush1.bf16.msra.mxu0 %v368
    %468 = vmatprep.subr.bf16.mxu0 0
    %469 = vmatpush1.bf16.msra.mxu0 %v367
    %470 = vmatprep.subr.bf16.mxu0 0
    %471 = vmatpush1.bf16.msra.mxu0 %v366
    %472 = vmatprep.subr.bf16.mxu0 0
    %473 = vmatpush1.bf16.msra.mxu0 %v365
    %474 = vmatprep.subr.bf16.mxu0 0
    %475 = vmatpush1.bf16.msra.mxu0 %v364
    %476 = vmatprep.subr.bf16.mxu0 0
    %477 = vmatpush1.bf16.msra.mxu0 %v363
    %478 = vmatprep.subr.bf16.mxu0 0
    %479 = vmatpush1.bf16.msra.mxu0 %v362
    %480 = vmatprep.subr.bf16.mxu0 0
    %481 = vmatpush2.bf16.msra.mxu0 %v377
    %482 = vmatprep.subr.bf16.mxu0 0
    %483 = vmatpush2.bf16.msra.mxu0 %v376
    %484 = vmatprep.subr.bf16.mxu0 0
    %485 = vmatpush2.bf16.msra.mxu0 %v375
    %486 = vmatprep.subr.bf16.mxu0 0
    %487 = vmatpush2.bf16.msra.mxu0 %v374
    %488 = vmatprep.subr.bf16.mxu0 0
    %489 = vmatpush2.bf16.msra.mxu0 %v373
    %490 = vmatprep.subr.bf16.mxu0 0
    %491 = vmatpush2.bf16.msra.mxu0 %v372
    %492 = vmatprep.subr.bf16.mxu0 0
    %493 = vmatpush2.bf16.msra.mxu0 %v371
    %494 = vmatprep.subr.bf16.mxu0 0
    %495 = vmatpush2.bf16.msra.mxu0 %v370
    %496 = vmatprep.mubr.bf16.mxu0 %v154
    %497 = vmatmul.mubr.bf16.gmra.mxu0 %v153
    %v498 = vpop.f32.mrf.mxu0
    %v499 = vadd.f32 %v140, %v498
    %v500 = vpop.f32.mrf.mxu0
    %v501 = vpop.f32.mrf.mxu0
    %v502 = vpop.f32.mrf.mxu0
    %503 = vdwg.mxu0
    %504 = vmatprep.subr.bf16.mxu0 0
    %505 = vmatpush1.bf16.msra.mxu0 %v385
    %506 = vmatprep.subr.bf16.mxu0 0
    %507 = vmatpush1.bf16.msra.mxu0 %v384
    %508 = vmatprep.subr.bf16.mxu0 0
    %509 = vmatpush1.bf16.msra.mxu0 %v383
    %510 = vmatprep.subr.bf16.mxu0 0
    %511 = vmatpush1.bf16.msra.mxu0 %v382
    %512 = vmatprep.subr.bf16.mxu0 0
    %513 = vmatpush1.bf16.msra.mxu0 %v381
    %514 = vmatprep.subr.bf16.mxu0 0
    %515 = vmatpush1.bf16.msra.mxu0 %v380
    %516 = vmatprep.subr.bf16.mxu0 0
    %517 = vmatpush1.bf16.msra.mxu0 %v379
    %518 = vmatprep.subr.bf16.mxu0 0
    %519 = vmatpush1.bf16.msra.mxu0 %v378
    %520 = vmatprep.subr.bf16.mxu0 0
    %521 = vmatpush2.bf16.msra.mxu0 %v393
    %522 = vmatprep.subr.bf16.mxu0 0
    %523 = vmatpush2.bf16.msra.mxu0 %v392
    %524 = vmatprep.subr.bf16.mxu0 0
    %525 = vmatpush2.bf16.msra.mxu0 %v391
    %526 = vmatprep.subr.bf16.mxu0 0
    %527 = vmatpush2.bf16.msra.mxu0 %v390
    %528 = vmatprep.subr.bf16.mxu0 0
    %529 = vmatpush2.bf16.msra.mxu0 %v389
    %530 = vmatprep.subr.bf16.mxu0 0
    %531 = vmatpush2.bf16.msra.mxu0 %v388
    %532 = vmatprep.subr.bf16.mxu0 0
    %533 = vmatpush2.bf16.msra.mxu0 %v387
    %534 = vmatprep.subr.bf16.mxu0 0
    %535 = vmatpush2.bf16.msra.mxu0 %v386
    %536 = vmatprep.mubr.bf16.mxu0 %v156
    %537 = vmatmul.mubr.bf16.gmra.mxu0 %v155
    %v538 = vpop.f32.mrf.mxu0
    %v539 = vadd.f32 %v499, %v538
    %v540 = vpop.f32.mrf.mxu0
    %v541 = vpop.f32.mrf.mxu0
    %v542 = vpop.f32.mrf.mxu0
    %543 = vdwg.mxu0
    %544 = vmatprep.subr.bf16.mxu0 0
    %545 = vmatpush1.bf16.msra.mxu0 %v401
    %546 = vmatprep.subr.bf16.mxu0 0
    %547 = vmatpush1.bf16.msra.mxu0 %v400
    %548 = vmatprep.subr.bf16.mxu0 0
    %549 = vmatpush1.bf16.msra.mxu0 %v399
    %550 = vmatprep.subr.bf16.mxu0 0
    %551 = vmatpush1.bf16.msra.mxu0 %v398
    %552 = vmatprep.subr.bf16.mxu0 0
    %553 = vmatpush1.bf16.msra.mxu0 %v397
    %554 = vmatprep.subr.bf16.mxu0 0
    %555 = vmatpush1.bf16.msra.mxu0 %v396
    %556 = vmatprep.subr.bf16.mxu0 0
    %557 = vmatpush1.bf16.msra.mxu0 %v395
    %558 = vmatprep.subr.bf16.mxu0 0
    %559 = vmatpush1.bf16.msra.mxu0 %v394
    %560 = vmatprep.subr.bf16.mxu0 0
    %561 = vmatpush2.bf16.msra.mxu0 %v409
    %562 = vmatprep.subr.bf16.mxu0 0
    %563 = vmatpush2.bf16.msra.mxu0 %v408
    %564 = vmatprep.subr.bf16.mxu0 0
    %565 = vmatpush2.bf16.msra.mxu0 %v407
    %566 = vmatprep.subr.bf16.mxu0 0
    %567 = vmatpush2.bf16.msra.mxu0 %v406
    %568 = vmatprep.subr.bf16.mxu0 0
    %569 = vmatpush2.bf16.msra.mxu0 %v405
    %570 = vmatprep.subr.bf16.mxu0 0
    %571 = vmatpush2.bf16.msra.mxu0 %v404
    %572 = vmatprep.subr.bf16.mxu0 0
    %573 = vmatpush2.bf16.msra.mxu0 %v403
    %574 = vmatprep.subr.bf16.mxu0 0
    %575 = vmatpush2.bf16.msra.mxu0 %v402
    %576 = vmatprep.mubr.bf16.mxu0 %v158
    %577 = vmatmul.mubr.bf16.gmra.mxu0 %v157
    %v578 = vpop.f32.mrf.mxu0
    %v579 = vadd.f32 %v539, %v578
    %v580 = vpop.f32.mrf.mxu0
    %v581 = vpop.f32.mrf.mxu0
    %v582 = vpop.f32.mrf.mxu0
    %583 = vdwg.mxu0
    %584 = vmatprep.subr.bf16.mxu0 0
    %585 = vmatpush1.bf16.msra.mxu0 0
    %586 = vmatprep.subr.bf16.mxu0 0
    %587 = vmatpush1.bf16.msra.mxu0 0
    %588 = vmatprep.subr.bf16.mxu0 0
    %589 = vmatpush1.bf16.msra.mxu0 0
    %590 = vmatprep.subr.bf16.mxu0 0
    %591 = vmatpush1.bf16.msra.mxu0 0
    %592 = vmatprep.subr.bf16.mxu0 0
    %593 = vmatpush1.bf16.msra.mxu0 0
    %594 = vmatprep.subr.bf16.mxu0 0
    %595 = vmatpush1.bf16.msra.mxu0 0
    %596 = vmatprep.subr.bf16.mxu0 0
    %597 = vmatpush1.bf16.msra.mxu0 0
    %598 = vmatprep.subr.bf16.mxu0 0
    %599 = vmatpush1.bf16.msra.mxu0 %v410
    %600 = vmatprep.subr.bf16.mxu0 0
    %601 = vmatpush2.bf16.msra.mxu0 0
    %602 = vmatprep.subr.bf16.mxu0 0
    %603 = vmatpush2.bf16.msra.mxu0 0
    %604 = vmatprep.subr.bf16.mxu0 0
    %605 = vmatpush2.bf16.msra.mxu0 0
    %606 = vmatprep.subr.bf16.mxu0 0
    %607 = vmatpush2.bf16.msra.mxu0 0
    %608 = vmatprep.subr.bf16.mxu0 0
    %609 = vmatpush2.bf16.msra.mxu0 0
    %610 = vmatprep.subr.bf16.mxu0 0
    %611 = vmatpush2.bf16.msra.mxu0 0
    %612 = vmatprep.subr.bf16.mxu0 0
    %613 = vmatpush2.bf16.msra.mxu0 0
    %614 = vmatprep.subr.bf16.mxu0 0
    %615 = vmatpush2.bf16.msra.mxu0 0
    %616 = vmatprep.mubr.bf16.mxu0 0
    %617 = vmatmul.mubr.bf16.gmra.mxu0 %v462
    %v618 = vpop.f32.mrf.mxu0
    %v619 = vadd.f32 %v579, %v618
    %v620 = vpop.f32.mrf.mxu0
    %v621 = vpop.f32.mrf.mxu0
    %v622 = vpop.f32.mrf.mxu0
    %623 = vdwg.mxu0
    %v624 = vmul.f32 %v619, %v619
    %v625 = vld [vmem:[%s3] sm:$0xff]
    %v626 = vld [vmem:[%s3 + $0x8] sm:$0xff]
    %v627 = vld [vmem:[%s3 + $0x10] sm:$0xff]
    %v628 = vld [vmem:[%s3 + $0x18] sm:$0xff]
    %v629 = vld [vmem:[%s3 + $0x20] sm:$0xff]
    %v630 = vld [vmem:[%s3 + $0x28] sm:$0xff]
    %v631 = vld [vmem:[%s3 + $0x30] sm:$0xff]
    %v632 = vld [vmem:[%s3 + $0x38] sm:$0xff]
    %v633 = vld [vmem:[%s3 + $0x40] sm:$0xff]
    %v634 = vld [vmem:[%s3 + $0x48] sm:$0xff]
    %v635 = vld [vmem:[%s3 + $0x50] sm:$0xff]
    %v636 = vld [vmem:[%s3 + $0x58] sm:$0xff]
    %v637 = vld [vmem:[%s3 + $0x60] sm:$0xff]
    %v638 = vld [vmem:[%s3 + $0x68] sm:$0xff]
    %v639 = vld [vmem:[%s3 + $0x70] sm:$0xff]
    %v640 = vld [vmem:[%s3 + $0x78] sm:$0xff]
    %641 = vmatprep.subr.mxu0 0.0
    %642 = vmatpush1.msra.mxu0 %v640
    %643 = vmatprep.subr.mxu0 0.0
    %644 = vmatpush1.msra.mxu0 %v639
    %645 = vmatprep.subr.mxu0 0.0
    %646 = vmatpush1.msra.mxu0 %v638
    %647 = vmatprep.subr.mxu0 0.0
    %648 = vmatpush1.msra.mxu0 %v637
    %649 = vmatprep.subr.mxu0 0.0
    %650 = vmatpush1.msra.mxu0 %v636
    %651 = vmatprep.subr.mxu0 0.0
    %652 = vmatpush1.msra.mxu0 %v635
    %653 = vmatprep.subr.mxu0 0.0
    %654 = vmatpush1.msra.mxu0 %v634
    %655 = vmatprep.subr.mxu0 0.0
    %656 = vmatpush1.msra.mxu0 %v633
    %657 = vmatprep.subr.mxu0 0.0
    %658 = vmatpush1.msra.mxu0 %v632
    %659 = vmatprep.subr.mxu0 0.0
    %660 = vmatpush1.msra.mxu0 %v631
    %661 = vmatprep.subr.mxu0 0.0
    %662 = vmatpush1.msra.mxu0 %v630
    %663 = vmatprep.subr.mxu0 0.0
    %664 = vmatpush1.msra.mxu0 %v629
    %665 = vmatprep.subr.mxu0 0.0
    %666 = vmatpush1.msra.mxu0 %v628
    %667 = vmatprep.subr.mxu0 0.0
    %668 = vmatpush1.msra.mxu0 %v627
    %669 = vmatprep.subr.mxu0 0.0
    %670 = vmatpush1.msra.mxu0 %v626
    %671 = vmatprep.subr.mxu0 0.0
    %672 = vmatpush1.msra.mxu0 %v625
    %673 = vmatprep.subr.mxu0 0.0
    %674 = vmatpush2.msra.mxu0 0.0
    %675 = vmatprep.subr.mxu0 0.0
    %676 = vmatpush2.msra.mxu0 0.0
    %677 = vmatprep.subr.mxu0 0.0
    %678 = vmatpush2.msra.mxu0 0.0
    %679 = vmatprep.subr.mxu0 0.0
    %680 = vmatpush2.msra.mxu0 0.0
    %681 = vmatprep.subr.mxu0 0.0
    %682 = vmatpush2.msra.mxu0 0.0
    %683 = vmatprep.subr.mxu0 0.0
    %684 = vmatpush2.msra.mxu0 0.0
    %685 = vmatprep.subr.mxu0 0.0
    %686 = vmatpush2.msra.mxu0 0.0
    %687 = vmatprep.subr.mxu0 0.0
    %688 = vmatpush2.msra.mxu0 0.0
    %689 = vmatprep.subr.mxu0 0.0
    %690 = vmatpush2.msra.mxu0 0.0
    %691 = vmatprep.subr.mxu0 0.0
    %692 = vmatpush2.msra.mxu0 0.0
    %693 = vmatprep.subr.mxu0 0.0
    %694 = vmatpush2.msra.mxu0 0.0
    %695 = vmatprep.subr.mxu0 0.0
    %696 = vmatpush2.msra.mxu0 0.0
    %697 = vmatprep.subr.mxu0 0.0
    %698 = vmatpush2.msra.mxu0 0.0
    %699 = vmatprep.subr.mxu0 0.0
    %700 = vmatpush2.msra.mxu0 0.0
    %701 = vmatprep.subr.mxu0 0.0
    %702 = vmatpush2.msra.mxu0 0.0
    %703 = vmatprep.subr.mxu0 0.0
    %704 = vmatpush2.msra.mxu0 0.0
    %705 = vmatprep.mubr.f32.mxu0 0.0
    %706 = vmatmul.mubr.f32.gmra.mxu0 %v624
    %v707 = vpop.f32.mrf.mxu0
    %v708 = vadd.f32 0.0, %v707
    %v709 = vpop.f32.mrf.mxu0
    %710 = vdwg.mxu0
    %vm711 = vcmask 80896
    %v712 = vsel %vm711, %v708, -inf
    %713 = vmax.xlane.f32.xlu0 %v712
    %v714 = vpop.xlane.xlu0 %713
    %v715 = vsub.f32 %v708, %v714
    %v716 = vmul.f32 %v715, 1.442695
    %v717 = vpow.pop %v716
    %v718 = vsel %vm711, %v717, 0.0
    %719 = vadd.xlane.f32.xlu0 %v718
    %v720 = vpop.xlane.xlu0 %719
    %v721 = vlog2.pop %v720
    %v722 = vmul.f32 %v721, 0.6931472
    %v723 = vsub.f32 %v715, %v722
    %724 = vst.msk [vmem:[#allocation5] sm:$0xff] %vm711, %v723
    // Predicated region
    $region22: #{tpu_custom_call.1} parent=1 // pred_check
      _
    $region23: #{tpu_custom_call.1} parent=1 // pred_check_branch
      %726 = sbr.rel (0) target = $region25
    $region24: #{tpu_custom_call.1} parent=1 // pred_region
      %s728 = ssub.s32 128, 128
      %729 = vsyncadd [#allocation4], %s728
      %s731 = sshll.u32 [#allocation5], 4
      %s732 = int_to_ptr.vmem [resolvable:$true] %s731
      %734 = dma.vmem_to_hbm [thread:$0]  %s732, 128, %s4, [#allocation4]
    $region25: #{tpu_custom_call.1} parent=1 // pred_fallthru
      _
    // Predicated region
    $region26: #{tpu_custom_call.1} parent=1 // pred_check
      _
    $region27: #{tpu_custom_call.1} parent=1 // pred_check_branch
      %736 = sbr.rel (0) target = $region29
    $region28: #{tpu_custom_call.1} parent=1 // pred_region
      %737 = dma.done [#allocation4], 128
    $region29: #{tpu_custom_call.1} parent=1 // pred_fallthru
      _
    %738 = vsyncpa [#allocation3], 1
    %739 = vsyncpa [#allocation4], 1

</llo_original>
